<compile_context>
chip_gen: v5e
topology: v5e:2x2
jax: 0.10.0
libtpu: 0.0.40
codegen_flags: <defaults>
</compile_context>

<pallas_src>
import numpy as np
import jax
import jax.numpy as jnp
from jax.experimental import pallas as pl
from jax.experimental.pallas import tpu as pltpu

MAX_LEN = 80          # tokenizer(..., max_length=80)
SEQ_PAD = 128         # lane-aligned padded sequence length
B_PAD = 8             # sublane-aligned padded batch (one (8,128) int32 vreg tile)
LEN_LANE = SEQ_PAD - 1  # lane 127 carries the raw length (never a content lane)
UNK_ID = 0            # '<unk>'
PAD_ID = 0            # pad_token=' ' not in vocab -> pads become '<unk>' (as in HF)
BOS_ID = 1            # '<s>'
EOS_ID = 2            # '</s>'  (add_eos_token = True)
KEEP_SHIFT = 16       # keep flag packed into bit 16 of each output id
N_SPECIAL = 3
VOCAB_SIZE = 32000


def _tokenize_kernel(raw_ref, out_ref):
    # raw_ref : VMEM (B_PAD, SEQ_PAD) int32
    #           lanes 0..78  : raw ids (BOS + content), UNK-padded on the right
    #           lane  127    : raw length of the row (BOS + content tokens)
    # out_ref : VMEM (B_PAD, SEQ_PAD) int32
    #           bits 0..15 : padded/truncated input_ids
    #           bit  16    : 1 where the token survives the '<unk>' filter AND
    #                        the trailing [:-1] drop (EOS removed), else 0
    raw = raw_ref[...]
    n = jnp.minimum(raw[:, LEN_LANE:LEN_LANE + 1], MAX_LEN - 1)   # (B_PAD, 1); room for EOS
    pos = jax.lax.broadcasted_iota(jnp.int32, (B_PAD, SEQ_PAD), 1)
    in_content = pos < n
    ids = jnp.where(in_content, raw,
                    jnp.where(pos == n, EOS_ID, PAD_ID)).astype(jnp.int32)
    keep = (in_content & (raw != UNK_ID)).astype(jnp.int32)       # pads==unk filtered, EOS dropped
    out_ref[...] = ids | (keep << KEEP_SHIFT)                     # single full-tile lane-dense store


@jax.jit
def pallas_tokenize(raw_ids):
    """raw_ids: (B_PAD, SEQ_PAD) int32 (lengths in lane 127)
       -> (B_PAD, SEQ_PAD) int32 packed: bits 0..15 = ids, bit 16 = keep."""
    return pl.pallas_call(
        _tokenize_kernel,
        out_shape=jax.ShapeDtypeStruct((B_PAD, SEQ_PAD), jnp.int32),
        in_specs=[pl.BlockSpec(memory_space=pltpu.MemorySpace.VMEM)],
        out_specs=pl.BlockSpec(memory_space=pltpu.MemorySpace.VMEM),
    )(raw_ids)


class Tokenizer:
    """Synthetic, deterministic stand-in for the LlamaTokenizer wrapper."""

    def __init__(self):
        # TODO(synk): real SentencePiece BPE (string -> ids) has no Pallas
        # equivalent; a deterministic hashed word-level vocab is used instead.
        self._id_to_tok = {UNK_ID: '<unk>', BOS_ID: '<s>', EOS_ID: '</s>'}

    def _piece_to_id(self, piece):
        h = 0
        for c in piece:
            h = (h * 131 + ord(c)) % (VOCAB_SIZE - N_SPECIAL)
        tid = N_SPECIAL + h
        self._id_to_tok[tid] = piece
        return tid

    def _encode_raw(self, text):
        text = 'summarize: ' + text
        pieces = ['▁' + w for w in text.split()]
        return [BOS_ID] + [self._piece_to_id(p) for p in pieces]

    def forward_batch(self, texts):
        """Up to B_PAD texts per call; amortizes dispatch + H2D/D2H over 8 rows."""
        assert 1 <= len(texts) <= B_PAD
        raw_buf = np.full((B_PAD, SEQ_PAD), UNK_ID, dtype=np.int32)
        for r, t in enumerate(texts):
            raw = self._encode_raw(t)
            k = min(len(raw), MAX_LEN - 1)            # only lanes < 79 are ever content
            raw_buf[r, :k] = np.asarray(raw[:k], dtype=np.int32)
            raw_buf[r, LEN_LANE] = len(raw)           # length stashed in lane 127

        packed = jax.block_until_ready(pallas_tokenize(jnp.asarray(raw_buf)))

        # one device->host transfer; unpack ids + keep with a shift/mask
        host = np.asarray(jax.device_get(packed))
        ids_all = (host & ((1 << KEEP_SHIFT) - 1)).astype(np.int64)
        keep_all = (host >> KEEP_SHIFT) & 1

        input_ids = ids_all[:len(texts), :MAX_LEN]    # built from host buffer, int64 like torch
        token_lists = []
        for r in range(len(texts)):
            # equivalent to: convert_ids_to_tokens -> drop '<unk>' -> drop last ([:-1])
            toks = [self._id_to_tok.get(int(i), '<unk>') for i in ids_all[r, :MAX_LEN]]
            token_lists.append(
                [t for t, m in zip(toks, keep_all[r, :MAX_LEN]) if int(m) == 1])
        return input_ids, token_lists

    def forward(self, text):
        # original module semantics: single string -> ((1, 80) ids, token_lst)
        input_ids, token_lists = self.forward_batch([text])
        return input_ids[:1], token_lists[0]

    __call__ = forward


if __name__ == "__main__":
    # deterministic example texts built from PRNGKey(0)
    words = ["the", "quick", "brown", "fox", "jumps", "over", "lazy", "dog"]
    key = jax.random.PRNGKey(0)
    idx = np.asarray(jax.random.randint(key, (4, 8), 0, len(words)))
    texts = [" ".join(words[int(i)] for i in row) for row in idx]

    tok = Tokenizer()

    # batched path: one pallas_call / H2D / D2H for all texts
    ids_b, tok_lists = tok.forward_batch(texts)
    assert ids_b.shape == (len(texts), MAX_LEN) and ids_b.dtype == np.int64
    for r, t in enumerate(texts):
        assert int(ids_b[r, 0]) == BOS_ID
        assert tok_lists[r][0] == '<s>'
        assert '<unk>' not in tok_lists[r] and '</s>' not in tok_lists[r]
        # token_lst length == number of raw tokens kept (BOS + pieces), EOS/pads removed
        assert len(tok_lists[r]) == 1 + len(('summarize: ' + t).split())

    # single-text path, matching the original module's forward(text) signature
    input_ids, token_lst = tok(texts[0])
    assert input_ids.shape == (1, MAX_LEN) and input_ids.dtype == np.int64
    assert token_lst == tok_lists[0]

    print("KERNEL_OK")
</pallas_src>

<mosaic_0001>
module attributes {stable_mosaic.version = 11 : i64} {
  func.func @_tokenize_kernel(%arg0: memref<8x128xi32, #tpu.memory_space<vmem>>, %arg1: memref<8x128xi32, #tpu.memory_space<vmem>>) attributes {dimension_semantics = [], scalar_prefetch = 0 : i64, scratch_operands = 0 : i64, tpu.core_type = #tpu.core_type<tc>} {
    %c0 = arith.constant 0 : index
    %c0_0 = arith.constant 0 : index
    %0 = vector.load %arg0[%c0, %c0_0] : memref<8x128xi32, #tpu.memory_space<vmem>>, vector<8x128xi32>
    %1 = vector.extract_strided_slice %0 {offsets = [0, 127], sizes = [8, 1], strides = [1, 1]} : vector<8x128xi32> to vector<8x1xi32>
    %c79_i32 = arith.constant 79 : i32
    %2 = vector.broadcast %c79_i32 : i32 to vector<8x1xi32>
    %3 = arith.minsi %1, %2 : vector<8x1xi32>
    %4 = tpu.iota {dimensions = array<i32: 1>} : vector<8x128xi32>
    %5 = vector.broadcast %3 : vector<8x1xi32> to vector<8x128xi32>
    %6 = arith.cmpi slt, %4, %5 : vector<8x128xi32>
    %7 = vector.broadcast %3 : vector<8x1xi32> to vector<8x128xi32>
    %8 = arith.cmpi eq, %4, %7 : vector<8x128xi32>
    %c2_i32 = arith.constant 2 : i32
    %c0_i32 = arith.constant 0 : i32
    %9 = vector.broadcast %c2_i32 : i32 to vector<8x128xi32>
    %10 = vector.broadcast %c0_i32 : i32 to vector<8x128xi32>
    %11 = arith.select %8, %9, %10 : vector<8x128xi1>, vector<8x128xi32>
    %12 = arith.select %6, %0, %11 : vector<8x128xi1>, vector<8x128xi32>
    %c0_i32_1 = arith.constant 0 : i32
    %13 = vector.broadcast %c0_i32_1 : i32 to vector<8x128xi32>
    %14 = arith.cmpi ne, %0, %13 : vector<8x128xi32>
    %15 = arith.andi %6, %14 : vector<8x128xi1>
    %16 = arith.extui %15 : vector<8x128xi1> to vector<8x128xi32>
    %c16_i32 = arith.constant 16 : i32
    %17 = vector.broadcast %c16_i32 : i32 to vector<8x128xi32>
    %18 = arith.shli %16, %17 : vector<8x128xi32>
    %19 = arith.ori %12, %18 : vector<8x128xi32>
    %c0_2 = arith.constant 0 : index
    %c0_3 = arith.constant 0 : index
    %20 = vector.load %arg1[%c0_2, %c0_3] : memref<8x128xi32, #tpu.memory_space<vmem>>, vector<8x128xi32>
    tpu.vector_store %arg1[%c0_2, %c0_3], %19 {strides = array<i32>} : memref<8x128xi32, #tpu.memory_space<vmem>>, vector<8x128xi32>,
    return
  }
}

</mosaic_0001>

<llo_original>
// kernel: pallas_tokenize.1
$region0: #{pallas_tokenize.1}
  #allocation0 [shape = 'u32[]', space=smem, size = 0x4, offset = 0x4, fixed_abs, tag = 'smem constant byte address 0x4 - core index']
  #allocation1 [shape = 'u32[72,128]{1,0:T(1,128)}', space=vmem, size = 0x9000, scoped, tag = 'internal scratch']
  %s0 = inlined_call_operand.hbm [shape: s32[8,128], index: 0, kind: input, shape index: {}]
  %s1 = inlined_call_operand.hbm [shape: s32[8,128], index: 1, kind: output, shape index: {}]
  %s2 = sld [smem:[#allocation0]]
  $region18: #{pallas_tokenize.1} parent=0
    _
  %s4 = ssub.s32 1, %s2
  %s5 = scalar_select 0, %s4, %s2
  $region1: #{pallas_tokenize.1} parent=0
    #allocation2 [shape = 'u8[4096]{0}', space=vmem, size = 0x1000, scoped, tag = 'input window, operand 0, single buffered']
    #allocation3 [shape = 's32[1]{0}', space=sflag, size = 0x4, scoped, tag = 'scoped memory for pallas_tokenize.1']
    #allocation4 [shape = 's32[1]{0}', space=sflag, size = 0x4, scoped, tag = 'scoped memory for pallas_tokenize.1']
    #allocation5 [shape = 'u8[4096]{0}', space=vmem, size = 0x1000, scoped, tag = 'output window, operand 0, single buffered']
    %6 = vsyncpa [#allocation3], 0
    %7 = vsyncpa [#allocation4], 0
    // Predicated region
    $region2: #{pallas_tokenize.1} parent=1 // pred_check
      _
    $region3: #{pallas_tokenize.1} parent=1 // pred_check_branch
      %9 = sbr.rel (0) target = $region5
    $region4: #{pallas_tokenize.1} parent=1 // pred_region
      %11 = vsyncadd [#allocation3], 0
      %s13 = sshll.u32 %s0, 4
      %s14 = int_to_ptr.hbm [resolvable:$true] %s13
      %s15 = sshll.u32 [#allocation2], 4
      %s16 = int_to_ptr.vmem [resolvable:$true] %s15
      %18 = dma.hbm_to_vmem [thread:$0]  %s14, 128, %s16, [#allocation3]
    $region5: #{pallas_tokenize.1} parent=1 // pred_fallthru
      _
    // Predicated region
    $region6: #{pallas_tokenize.1} parent=1 // pred_check
      _
    $region7: #{pallas_tokenize.1} parent=1 // pred_check_branch
      %20 = sbr.rel (0) target = $region9
    $region8: #{pallas_tokenize.1} parent=1 // pred_region
      %22 = dma.done [#allocation3], 128
    $region9: #{pallas_tokenize.1} parent=1 // pred_fallthru
      _
    %v23 = vld [vmem:[#allocation2] sm:$0xff]
    %vm24 = vcmp.lt.s32.totalorder %v23, 79
    %v25 = vsel %vm24, %v23, 79
    %v26 = vlaneseq
    %v27 = vand.u32 %v26, 127
    %28 = vset.pattern.permute.xlu0 127
    %29 = vperm.xlu0 %28, %v25
    %v30 = vpop.permute.xlu0 %29
    %vm31 = vcmp.lt.s32.totalorder %v27, %v30
    %vm32 = vcmp.eq.s32.totalorder %v27, %v30
    %v33 = vsel %vm32, 2, 0
    %v34 = vsel %vm31, %v23, %v33
    %vm35 = vcmp.ne.s32.totalorder %v23, 0
    %vm36 = vmand %vm31, %vm35
    %v37 = vsel %vm36, 1, 0
    %v38 = vshll.u32 %v37, 16
    %v39 = vor.u32 %v34, %v38
    %40 = vst [vmem:[#allocation5] sm:$0xff] %v39
    // Predicated region
    $region10: #{pallas_tokenize.1} parent=1 // pred_check
      _
    $region11: #{pallas_tokenize.1} parent=1 // pred_check_branch
      %42 = sbr.rel (0) target = $region13
    $region12: #{pallas_tokenize.1} parent=1 // pred_region
      %44 = vsyncadd [#allocation4], 0
      %s46 = sshll.u32 [#allocation5], 4
      %s47 = int_to_ptr.vmem [resolvable:$true] %s46
      %s48 = sshll.u32 %s1, 4
      %s49 = int_to_ptr.hbm [resolvable:$true] %s48
      %51 = dma.vmem_to_hbm [thread:$0]  %s47, 128, %s49, [#allocation4]
    $region13: #{pallas_tokenize.1} parent=1 // pred_fallthru
      _
    // Predicated region
    $region14: #{pallas_tokenize.1} parent=1 // pred_check
      _
    $region15: #{pallas_tokenize.1} parent=1 // pred_check_branch
      %53 = sbr.rel (0) target = $region17
    $region16: #{pallas_tokenize.1} parent=1 // pred_region
      %55 = dma.done [#allocation4], 128
    $region17: #{pallas_tokenize.1} parent=1 // pred_fallthru
      _
    %56 = vsyncpa [#allocation3], 1
    %57 = vsyncpa [#allocation4], 1

</llo_original>
